<compile_context>
chip_gen: v7x
topology: tpu7x:2x2x1
jax: 0.10.0
libtpu: 0.0.40
codegen_flags: <defaults>
</compile_context>

<pallas_src>
import functools

import jax
import jax.numpy as jnp
from jax.experimental import pallas as pl
from jax.experimental.pallas import tpu as pltpu


# --------------------------------------------------------------------------------------
# Small helpers
# --------------------------------------------------------------------------------------
def _round_up(n, m):
    return ((n + m - 1) // m) * m


def _pick_tile(dim, candidates):
    """Largest candidate that evenly divides `dim`; fall back to the full dim
    (a block equal to the full array dim is always legal w.r.t. the (8,128) rule)."""
    for c in candidates:
        if c <= dim and dim % c == 0:
            return c
    return dim


# --------------------------------------------------------------------------------------
# Shared (non-individual) linear:  y = x @ W^T + b   [optional sigmoid-range squash]
# Tiled (M, N, K) matmul, f32 VMEM accumulator, bias/activation in the K-finalize branch.
# --------------------------------------------------------------------------------------
def _linear_tiled_kernel(x_ref, wt_ref, b_ref, o_ref, acc_ref, *, y_range):
    k = pl.program_id(2)

    @pl.when(k == 0)
    def _():
        acc_ref[...] = jnp.zeros_like(acc_ref)

    acc_ref[...] += jnp.dot(
        x_ref[...], wt_ref[...], preferred_element_type=jnp.float32
    )

    @pl.when(k == pl.num_programs(2) - 1)
    def _():
        y = acc_ref[...] + b_ref[...]
        if y_range is not None:                       # trace-time branch
            lo, hi = y_range
            y = jax.nn.sigmoid(y) * (hi - lo) + lo
        o_ref[...] = y.astype(o_ref.dtype)


def pallas_linear(x2d, wt_pad, b_pad, out_dim, y_range=None):
    """x2d: [R, In]; wt_pad: [In, OutPad] (pre-transposed, lane-padded, param dtype);
    b_pad: [1, OutPad] float32.  Returns [R, out_dim] in the compute dtype."""
    R, In = x2d.shape
    In_w, OutPad = wt_pad.shape
    assert In == In_w
    x2d = x2d.astype(wt_pad.dtype)                    # no f32 upcast; bf16 stays bf16

    tm = _pick_tile(R, (256, 128))
    tn = _pick_tile(OutPad, (512, 256, 128))
    tk = _pick_tile(In, (512, 256, 128))
    grid = (R // tm, OutPad // tn, In // tk)          # K (reduction) axis last

    kernel = functools.partial(_linear_tiled_kernel, y_range=y_range)

    out = pl.pallas_call(
        kernel,
        out_shape=jax.ShapeDtypeStruct((R, OutPad), x2d.dtype),
        grid_spec=pltpu.PrefetchScalarGridSpec(
            num_scalar_prefetch=0,
            grid=grid,
            in_specs=[
                pl.BlockSpec((tm, tk), lambda i, j, k: (i, k)),
                pl.BlockSpec((tk, tn), lambda i, j, k: (k, j)),
                pl.BlockSpec((1, tn), lambda i, j, k: (0, j)),
            ],
            out_specs=pl.BlockSpec((tm, tn), lambda i, j, k: (i, j)),
            scratch_shapes=[pltpu.VMEM((tm, tn), jnp.float32)],
        ),
        compiler_params=pltpu.CompilerParams(
            dimension_semantics=("parallel", "parallel", "arbitrary")),
    )(x2d, wt_pad, b_pad)
    return out[:, :out_dim]


# --------------------------------------------------------------------------------------
# Individual (per-variable) linear, fused into ONE pallas_call.
# Batched einsum over the whole [nvars, In, OutPad] weight stack, K-tiled.
# --------------------------------------------------------------------------------------
def _individual_kernel(x_ref, wt_ref, b_ref, o_ref, acc_ref):
    k = pl.program_id(0)

    @pl.when(k == 0)
    def _():
        acc_ref[...] = jnp.zeros_like(acc_ref)

    acc_ref[...] += jnp.einsum(
        "vbk,vko->vbo", x_ref[...], wt_ref[...],
        preferred_element_type=jnp.float32,
    )

    @pl.when(k == pl.num_programs(0) - 1)
    def _():
        o_ref[...] = (acc_ref[...] + b_ref[...]).astype(o_ref.dtype)


def pallas_individual_linear(xv, wt_pad, b_pad, out_dim):
    """xv: [nvars, bs, In]; wt_pad: [nvars, In, OutPad]; b_pad: [nvars, 1, OutPad] f32.
    Returns [nvars, bs, out_dim]."""
    nvars, bs, In = xv.shape
    _, _, OutPad = wt_pad.shape
    xv = xv.astype(wt_pad.dtype)

    # keep the per-step weight block (double-buffered) comfortably under ~8 MiB
    itemsize = jnp.dtype(wt_pad.dtype).itemsize
    budget = 8 * 1024 * 1024
    tk = In
    for c in (1024, 512, 256, 128):
        if c <= In and In % c == 0 and nvars * c * OutPad * itemsize <= budget:
            tk = c
            break
    grid = (In // tk,)                                # pure K reduction

    out = pl.pallas_call(
        _individual_kernel,
        out_shape=jax.ShapeDtypeStruct((nvars, bs, OutPad), xv.dtype),
        grid_spec=pltpu.PrefetchScalarGridSpec(
            num_scalar_prefetch=0,
            grid=grid,
            in_specs=[
                pl.BlockSpec((nvars, bs, tk), lambda k: (0, 0, k)),
                pl.BlockSpec((nvars, tk, OutPad), lambda k: (0, k, 0)),
                pl.BlockSpec((nvars, 1, OutPad), lambda k: (0, 0, 0)),
            ],
            out_specs=pl.BlockSpec((nvars, bs, OutPad), lambda k: (0, 0, 0)),
            scratch_shapes=[pltpu.VMEM((nvars, bs, OutPad), jnp.float32)],
        ),
        compiler_params=pltpu.CompilerParams(
            dimension_semantics=("arbitrary",)),
    )(xv, wt_pad, b_pad)
    return out[:, :, :out_dim]


# --------------------------------------------------------------------------------------
# DownstreamHead equivalent
# --------------------------------------------------------------------------------------
class DownstreamHeadPallas:
    def __init__(self, c_in, target_dim, num_patch, d_model, head_dropout,
                 individual, head_type, y_range=None, key=None,
                 param_dtype=jnp.float32):
        assert head_type in ("prediction", "regression", "classification")
        self.c_in = c_in
        self.target_dim = target_dim
        self.num_patch = num_patch
        self.d_model = d_model
        self.individual = individual
        self.head_type = head_type
        self.y_range = y_range
        self.param_dtype = param_dtype
        self.out_pad = _round_up(target_dim, 128)     # lane-dense output columns
        key = jax.random.PRNGKey(0) if key is None else key
        pad_n = self.out_pad - target_dim

        kw, kb = jax.random.split(key)
        if head_type == "prediction":
            head_dim = d_model * num_patch
            if individual:
                W = 0.02 * jax.random.normal(kw, (c_in, target_dim, head_dim), jnp.float32)
                b = 0.02 * jax.random.normal(kb, (c_in, target_dim), jnp.float32)
                self.W = W.astype(param_dtype)        # torch layout, for reference
                self.b = b                            # bias kept in f32
                wt = jnp.transpose(self.W, (0, 2, 1))                 # [c_in, head_dim, target_dim]
                self.Wt_pad = jnp.pad(wt, ((0, 0), (0, 0), (0, pad_n)))
                self.b_pad = jnp.pad(self.b, ((0, 0), (0, pad_n))
                                     ).reshape(c_in, 1, self.out_pad).astype(jnp.float32)
            else:
                W = 0.02 * jax.random.normal(kw, (target_dim, head_dim), jnp.float32)
                b = 0.02 * jax.random.normal(kb, (target_dim,), jnp.float32)
                self.W = W.astype(param_dtype)
                self.b = b
                self.Wt_pad = jnp.pad(self.W.T, ((0, 0), (0, pad_n)))  # [head_dim, OutPad]
                self.b_pad = jnp.pad(self.b, ((0, pad_n),)
                                     ).reshape(1, self.out_pad).astype(jnp.float32)
        else:  # regression / classification
            in_dim = c_in * d_model
            W = 0.02 * jax.random.normal(kw, (target_dim, in_dim), jnp.float32)
            b = 0.02 * jax.random.normal(kb, (target_dim,), jnp.float32)
            self.W = W.astype(param_dtype)
            self.b = b
            self.Wt_pad = jnp.pad(self.W.T, ((0, 0), (0, pad_n)))      # [in_dim, OutPad]
            self.b_pad = jnp.pad(self.b, ((0, pad_n),)
                                 ).reshape(1, self.out_pad).astype(jnp.float32)

    def __call__(self, x):
        """x: [bs, nvars, d_model, num_patch]"""
        bs, nvars, d_model, num_patch = x.shape
        if self.head_type == "prediction":
            # flatten(start_dim=-2): [bs, nvars, d_model*num_patch]  (free, contiguous)
            x_flat = x.reshape(bs, nvars, d_model * num_patch)
            if self.individual:
                xv = jnp.transpose(x_flat, (1, 0, 2))                 # [nvars, bs, head_dim]
                yv = pallas_individual_linear(xv, self.Wt_pad, self.b_pad, self.target_dim)
                return jnp.transpose(yv, (1, 2, 0))                   # [bs, target_dim, nvars]
            y2 = pallas_linear(x_flat.reshape(bs * nvars, -1),
                               self.Wt_pad, self.b_pad, self.target_dim)
            y = y2.reshape(bs, nvars, self.target_dim)
            return jnp.transpose(y, (0, 2, 1))                        # [bs, target_dim, nvars]
        else:
            # last patch only: tiny strided slice (reads only bs*nvars*d_model elements)
            # TODO(synk): could be folded into the BlockSpec with pl.Element on the patch axis.
            x_last = x[:, :, :, -1].reshape(bs, nvars * d_model)
            yr = self.y_range if self.head_type == "regression" else None
            return pallas_linear(x_last, self.Wt_pad, self.b_pad,
                                 self.target_dim, y_range=yr)          # [bs, target_dim]


# --------------------------------------------------------------------------------------
# Pure-JAX reference (mirrors the PyTorch semantics; honors the parameter dtype)
# --------------------------------------------------------------------------------------
def _ref_forward(head, x):
    bs, nvars, d_model, num_patch = x.shape
    cd = head.W.dtype
    Wf = head.W.astype(jnp.float32)
    bf = head.b.astype(jnp.float32)
    if head.head_type == "prediction":
        x_flat = x.reshape(bs, nvars, d_model * num_patch).astype(cd).astype(jnp.float32)
        if head.individual:
            ys = [x_flat[:, i, :] @ Wf[i].T + bf[i] for i in range(nvars)]
            y = jnp.stack(ys, axis=1)
        else:
            y = x_flat @ Wf.T + bf
        return jnp.transpose(y, (0, 2, 1))
    else:
        x_last = x[:, :, :, -1].reshape(bs, nvars * d_model).astype(cd).astype(jnp.float32)
        y = x_last @ Wf.T + bf
        if head.head_type == "regression" and head.y_range is not None:
            lo, hi = head.y_range
            y = jax.nn.sigmoid(y) * (hi - lo) + lo
        return y


if __name__ == "__main__":
    key = jax.random.PRNGKey(0)
    bs, c_in, d_model, num_patch, target_dim = 2, 4, 64, 16, 16
    kx, kp = jax.random.split(key)
    x = jax.random.normal(kx, (bs, c_in, d_model, num_patch), jnp.float32)

    configs = [
        dict(individual=False, head_type="prediction", y_range=None,
             param_dtype=jnp.float32, atol=1e-4),
        dict(individual=True,  head_type="prediction", y_range=None,
             param_dtype=jnp.float32, atol=1e-4),
        dict(individual=False, head_type="regression", y_range=(0.0, 5.0),
             param_dtype=jnp.float32, atol=1e-4),
        dict(individual=False, head_type="classification", y_range=None,
             param_dtype=jnp.float32, atol=1e-4),
        dict(individual=False, head_type="prediction", y_range=None,
             param_dtype=jnp.bfloat16, atol=2e-2),   # bf16 operands, f32 accumulation
    ]

    ok = True
    for cfg in configs:
        head = DownstreamHeadPallas(
            c_in=c_in, target_dim=target_dim, num_patch=num_patch, d_model=d_model,
            head_dropout=0.0, individual=cfg["individual"], head_type=cfg["head_type"],
            y_range=cfg["y_range"], key=kp, param_dtype=cfg["param_dtype"],
        )
        out = jax.block_until_ready(head(x))
        ref = _ref_forward(head, x)
        tol = cfg["atol"]
        if not jnp.allclose(out.astype(jnp.float32), ref, atol=tol, rtol=tol):
            ok = False
            err = float(jnp.max(jnp.abs(out.astype(jnp.float32) - ref)))
            print(f"MISMATCH for {cfg}: max abs err {err}")

    if ok:
        print("KERNEL_OK")
</pallas_src>

<mosaic_0001>
module attributes {stable_mosaic.version = 11 : i64} {
  func.func @_linear_tiled_kernel(%arg0: i32, %arg1: i32, %arg2: i32, %arg3: memref<8x512xf32, #tpu.memory_space<vmem>>, %arg4: memref<512x128xf32, #tpu.memory_space<vmem>>, %arg5: memref<1x128xf32, #tpu.memory_space<vmem>>, %arg6: memref<8x128xf32, #tpu.memory_space<vmem>>, %arg7: memref<8x128xf32, #tpu.memory_space<vmem>>) attributes {dimension_semantics = [#tpu.dimension_semantics<parallel>, #tpu.dimension_semantics<parallel>, #tpu.dimension_semantics<arbitrary>], iteration_bounds = array<i64: 1, 1, 2>, scalar_prefetch = 0 : i64, scratch_operands = 1 : i64, tpu.core_type = #tpu.core_type<tc>, window_params = [{transform_indices = @transform_0, window_bounds = array<i64: 8, 512>}, {transform_indices = @transform_1, window_bounds = array<i64: 512, 128>}, {transform_indices = @transform_2, window_bounds = array<i64: 1, 128>}, {transform_indices = @transform_3, window_bounds = array<i64: 8, 128>}]} {
    %c0_i32 = arith.constant 0 : i32
    %0 = arith.cmpi eq, %arg2, %c0_i32 : i32
    %1 = arith.extui %0 : i1 to i32
    %c0_i32_0 = arith.constant 0 : i32
    %2 = arith.cmpi ne, %1, %c0_i32_0 : i32
    scf.if %2 {
      %cst_9 = arith.constant 0.000000e+00 : f32
      %12 = vector.broadcast %cst_9 : f32 to vector<8x128xf32>
      %c0_10 = arith.constant 0 : index
      %c0_11 = arith.constant 0 : index
      %13 = vector.load %arg7[%c0_10, %c0_11] : memref<8x128xf32, #tpu.memory_space<vmem>>, vector<8x128xf32>
      tpu.vector_store %arg7[%c0_10, %c0_11], %12 {strides = array<i32>} : memref<8x128xf32, #tpu.memory_space<vmem>>, vector<8x128xf32>,
    } else {
    }
    %c0 = arith.constant 0 : index
    %c0_1 = arith.constant 0 : index
    %3 = vector.load %arg7[%c0, %c0_1] : memref<8x128xf32, #tpu.memory_space<vmem>>, vector<8x128xf32>
    %c0_2 = arith.constant 0 : index
    %c0_3 = arith.constant 0 : index
    %4 = vector.load %arg3[%c0_2, %c0_3] : memref<8x512xf32, #tpu.memory_space<vmem>>, vector<8x512xf32>
    %c0_4 = arith.constant 0 : index
    %c0_5 = arith.constant 0 : index
    %5 = vector.load %arg4[%c0_4, %c0_5] : memref<512x128xf32, #tpu.memory_space<vmem>>, vector<512x128xf32>
    %cst = arith.constant dense<0.000000e+00> : vector<8x128xf32>
    %6 = tpu.matmul %4, %5, %cst {dimension_numbers = #tpu.dot_dimension_numbers<[1], [0], [0], [1], [0, 0, 1, 1], [], []>} : vector<8x512xf32>, vector<512x128xf32>, vector<8x128xf32> -> vector<8x128xf32>
    %7 = arith.addf %3, %6 : vector<8x128xf32>
    %c0_6 = arith.constant 0 : index
    %c0_7 = arith.constant 0 : index
    %8 = vector.load %arg7[%c0_6, %c0_7] : memref<8x128xf32, #tpu.memory_space<vmem>>, vector<8x128xf32>
    tpu.vector_store %arg7[%c0_6, %c0_7], %7 {strides = array<i32>} : memref<8x128xf32, #tpu.memory_space<vmem>>, vector<8x128xf32>,
    %c1_i32 = arith.constant 1 : i32
    %9 = arith.cmpi eq, %arg2, %c1_i32 : i32
    %10 = arith.extui %9 : i1 to i32
    %c0_i32_8 = arith.constant 0 : i32
    %11 = arith.cmpi ne, %10, %c0_i32_8 : i32
    scf.if %11 {
      %c0_9 = arith.constant 0 : index
      %c0_10 = arith.constant 0 : index
      %12 = vector.load %arg7[%c0_9, %c0_10] : memref<8x128xf32, #tpu.memory_space<vmem>>, vector<8x128xf32>
      %c0_11 = arith.constant 0 : index
      %c0_12 = arith.constant 0 : index
      %13 = vector.load %arg5[%c0_11, %c0_12] : memref<1x128xf32, #tpu.memory_space<vmem>>, vector<1x128xf32>
      %14 = vector.broadcast %13 : vector<1x128xf32> to vector<8x128xf32>
      %15 = arith.addf %12, %14 : vector<8x128xf32>
      %c0_13 = arith.constant 0 : index
      %c0_14 = arith.constant 0 : index
      %16 = vector.load %arg6[%c0_13, %c0_14] : memref<8x128xf32, #tpu.memory_space<vmem>>, vector<8x128xf32>
      tpu.vector_store %arg6[%c0_13, %c0_14], %15 {strides = array<i32>} : memref<8x128xf32, #tpu.memory_space<vmem>>, vector<8x128xf32>,
    } else {
    }
    return
  }
  func.func @transform_0(%arg0: i32, %arg1: i32, %arg2: i32) -> (i32, i32) {
    %c0_i32 = arith.constant 0 : i32
    return %arg0, %arg2 : i32, i32
  }
  func.func @transform_1(%arg0: i32, %arg1: i32, %arg2: i32) -> (i32, i32) {
    %c0_i32 = arith.constant 0 : i32
    return %arg2, %arg1 : i32, i32
  }
  func.func @transform_2(%arg0: i32, %arg1: i32, %arg2: i32) -> (i32, i32) {
    %c0_i32 = arith.constant 0 : i32
    %c0_i32_0 = arith.constant 0 : i32
    return %c0_i32, %arg1 : i32, i32
  }
  func.func @transform_3(%arg0: i32, %arg1: i32, %arg2: i32) -> (i32, i32) {
    %c0_i32 = arith.constant 0 : i32
    return %arg0, %arg1 : i32, i32
  }
}

</mosaic_0001>

<llo_original>
// kernel: tpu_custom_call.1
$region0: #{tpu_custom_call.1}
  #allocation0 [shape = 'u32[]', space=smem, size = 0x4, offset = 0x4, fixed_abs, tag = 'smem constant byte address 0x4 - core index']
  #allocation1 [shape = 'u32[144,128]{1,0:T(1,128)}', space=vmem, size = 0x12000, scoped, tag = 'internal scratch']
  #allocation2 [shape = 'f32[8,128]{1,0:T(8,128)}', space=vmem, size = 0x1000, scoped, tag = 'scratch operand']
  %s0 = inlined_call_operand.hbm [shape: f32[8,1024], index: 0, kind: input, shape index: {}]
  %s1 = inlined_call_operand.hbm [shape: f32[1024,128], index: 1, kind: input, shape index: {}]
  %s2 = inlined_call_operand.vmem [shape: f32[1,128], index: 2, kind: input, shape index: {}]
  %s3 = inlined_call_operand.hbm [shape: f32[8,128], index: 3, kind: output, shape index: {}]
  %s4 = sld [smem:[#allocation0]]
  $region61: #{tpu_custom_call.1} parent=0
    _
  %s6 = ssub.s32 1, %s4
  %s7 = scalar_select 0, %s6, %s4
  $region1: #{tpu_custom_call.1} parent=0
    #allocation3 [shape = 'u8[32768]{0}', space=vmem, size = 0x8000, scoped, tag = 'input window, operand 0']
    #allocation4 [shape = 's32[2]{0}', space=sflag, size = 0x8, scoped, tag = 'scoped memory for tpu_custom_call.1']
    #allocation5 [shape = 's32[2]{0}', space=sflag, size = 0x8, scoped, tag = 'scoped memory for tpu_custom_call.1']
    #allocation6 [shape = 'u8[524288]{0}', space=vmem, size = 0x80000, scoped, tag = 'input window, operand 1']
    #allocation7 [shape = 's32[2]{0}', space=sflag, size = 0x8, scoped, tag = 'scoped memory for tpu_custom_call.1']
    #allocation8 [shape = 'u8[4096]{0}', space=vmem, size = 0x1000, scoped, tag = 'output window, operand 0, single buffered']
    %8 = vsyncpa [#allocation4], 0
    %s9 = scalar_lea.sflag [#allocation4], 1
    %10 = vsyncpa %s9, 0
    %11 = vsyncpa [#allocation7], 0
    %s12 = scalar_lea.sflag [#allocation7], 1
    %13 = vsyncpa %s12, 0
    %14 = vsyncpa [#allocation5], 0
    loop: start=0, step=1, limit=4
    $region2: #{tpu_custom_call.1} parent=1 // loop_pre_header
      _
    $region3: #{tpu_custom_call.1} parent=1 // loop_header
      %s16 = sphi 0, %s20
      %p17 = scmp.ge.s32.totalorder %s16, 4
      %s23 = sphi 0, %s42
      %s24 = sphi 0, %s38
      %s25 = sphi 0, %s34
      %s26 = sphi 0, %s23
      %s27 = sphi 0, %s24
      %s28 = sphi 0, %s25
      %s29 = sphi 0, %s26
      %s30 = sphi 0, %s27
      %s31 = sphi 0, %s28
      %s47 = sphi 0, %s49
      %s50 = sphi 0, %s47
      %s51 = sphi 0, %s50
      %s67 = sphi 0, %s51
      %s75 = sphi 0, %s77
      %s78 = sphi 0, %s75
      %s79 = sphi 0, %s78
      %s95 = sphi 0, %s79
      %s101 = sphi 0, %s103
      %s104 = sphi 0, %s101
      %s105 = sphi 0, %s104
      %s121 = sphi 0, %s105
      %s129 = sphi 0, %s131
      %s132 = sphi 0, %s129
      %s133 = sphi 0, %s132
      %s149 = sphi 0, %s133
    $region4: #{tpu_custom_call.1} parent=1 // loop_header_branch
      %19 = sbr.rel (%p17) target = $region8
    $region5: #{tpu_custom_call.1} parent=1 // loop_body
      %s21 = ssub.s32 %s16, 1
      %s22 = ssub.s32 %s16, 2
      %s32 = sadd.s32 1, %s25
      %p33 = scmp.ge.s32.totalorder %s32, 2
      %s34 = scalar_select %p33, 0, %s32
      %s35 = sadd.s32 1, %s24
      %s36 = scalar_select %p33, %s35, %s24
      %p37 = scmp.ge.s32.totalorder %s36, 1
      %s38 = scalar_select %p37, 0, %s36
      %s39 = sadd.s32 1, %s23
      %s40 = scalar_select %p37, %s39, %s23
      %p41 = scmp.ge.s32.totalorder %s40, 1
      %s42 = scalar_select %p41, 0, %s40
      %s43 = ssub.s32 %s23, %s42
      %s44 = ssub.s32 %s25, %s34
      %s45 = sor.u32 %s43, %s44
      %p46 = scmp.eq.s32.totalorder %s45, 0
      %s48 = sadd.s32 %s47, 1
      %s49 = scalar_select %p46, %s47, %s48
      %p52 = pneg %p46
      %p53 = scmp.eq.s32.totalorder %s16, 1
      %p54 = por %p52, %p53
      %p55 = scmp.ne.s32.totalorder %s47, %s50
      %p56 = scmp.eq.s32.totalorder %s16, 0
      %p57 = por %p55, %p56
      %p58 = scmp.ne.s32.totalorder %s47, %s50
      %p59 = scmp.eq.s32.totalorder %s21, 1
      %p60 = por %p58, %p59
      %p61 = scmp.ne.s32.totalorder %s50, %s51
      %p62 = scmp.eq.s32.totalorder %s21, 0
      %p63 = por %p61, %p62
      %p64 = scmp.ne.s32.totalorder %s50, %s51
      %p65 = scmp.eq.s32.totalorder %s22, 1
      %p66 = por %p64, %p65
      %p68 = scmp.ne.s32.totalorder %s51, %s67
      %p69 = scmp.eq.s32.totalorder %s22, 0
      %p70 = por %p68, %p69
      %s71 = ssub.s32 %s25, %s34
      %s72 = ssub.s32 %s24, %s38
      %s73 = sor.u32 %s71, %s72
      %p74 = scmp.eq.s32.totalorder %s73, 0
      %s76 = sadd.s32 %s75, 1
      %s77 = scalar_select %p74, %s75, %s76
      %p80 = pneg %p74
      %p81 = scmp.eq.s32.totalorder %s16, 1
      %p82 = por %p80, %p81
      %p83 = scmp.ne.s32.totalorder %s75, %s78
      %p84 = scmp.eq.s32.totalorder %s16, 0
      %p85 = por %p83, %p84
      %p86 = scmp.ne.s32.totalorder %s75, %s78
      %p87 = scmp.eq.s32.totalorder %s21, 1
      %p88 = por %p86, %p87
      %p89 = scmp.ne.s32.totalorder %s78, %s79
      %p90 = scmp.eq.s32.totalorder %s21, 0
      %p91 = por %p89, %p90
      %p92 = scmp.ne.s32.totalorder %s78, %s79
      %p93 = scmp.eq.s32.totalorder %s22, 1
      %p94 = por %p92, %p93
      %p96 = scmp.ne.s32.totalorder %s79, %s95
      %p97 = scmp.eq.s32.totalorder %s22, 0
      %p98 = por %p96, %p97
      %s99 = ssub.s32 %s24, %s38
      %p100 = scmp.eq.s32.totalorder %s99, 0
      %s102 = sadd.s32 %s101, 1
      %s103 = scalar_select %p100, %s101, %s102
      %p106 = pneg %p100
      %p107 = scmp.eq.s32.totalorder %s16, 1
      %p108 = por %p106, %p107
      %p109 = scmp.ne.s32.totalorder %s101, %s104
      %p110 = scmp.eq.s32.totalorder %s16, 0
      %p111 = por %p109, %p110
      %p112 = scmp.ne.s32.totalorder %s101, %s104
      %p113 = scmp.eq.s32.totalorder %s21, 1
      %p114 = por %p112, %p113
      %p115 = scmp.ne.s32.totalorder %s104, %s105
      %p116 = scmp.eq.s32.totalorder %s21, 0
      %p117 = por %p115, %p116
      %p118 = scmp.ne.s32.totalorder %s104, %s105
      %p119 = scmp.eq.s32.totalorder %s22, 1
      %p120 = por %p118, %p119
      %p122 = scmp.ne.s32.totalorder %s105, %s121
      %p123 = scmp.eq.s32.totalorder %s22, 0
      %p124 = por %p122, %p123
      %s125 = ssub.s32 %s23, %s42
      %s126 = ssub.s32 %s24, %s38
      %s127 = sor.u32 %s125, %s126
      %p128 = scmp.eq.s32.totalorder %s127, 0
      %s130 = sadd.s32 %s129, 1
      %s131 = scalar_select %p128, %s129, %s130
      %p134 = pneg %p128
      %p135 = scmp.eq.s32.totalorder %s16, 1
      %p136 = por %p134, %p135
      %p137 = scmp.ne.s32.totalorder %s129, %s132
      %p138 = scmp.eq.s32.totalorder %s16, 0
      %p139 = por %p137, %p138
      %p140 = scmp.ne.s32.totalorder %s129, %s132
      %p141 = scmp.eq.s32.totalorder %s21, 1
      %p142 = por %p140, %p141
      %p143 = scmp.ne.s32.totalorder %s132, %s133
      %p144 = scmp.eq.s32.totalorder %s21, 0
      %p145 = por %p143, %p144
      %p146 = scmp.ne.s32.totalorder %s132, %s133
      %p147 = scmp.eq.s32.totalorder %s22, 1
      %p148 = por %p146, %p147
      %p150 = scmp.ne.s32.totalorder %s133, %s149
      %p151 = scmp.eq.s32.totalorder %s22, 0
      %p152 = por %p150, %p151
      %p153 = scmp.le.s32.totalorder 1, %s16
      %p154 = scmp.lt.s32.totalorder %s16, 3
      %p155 = pnand %p153, %p154
      %p156 = pneg %p155
      // Predicated region
      $region9: #{tpu_custom_call.1} parent=5 // pred_check
        _
      $region10: #{tpu_custom_call.1} parent=5 // pred_check_branch
        %158 = sbr.rel (%p155) target = $region12
      $region11: #{tpu_custom_call.1} parent=5 // pred_region
        %s159 = ssub.s32 %s16, 1
        // Predicated region
        $region13: #{tpu_custom_call.1} parent=11 // pred_check
          %p160 = pneg %p117
        $region14: #{tpu_custom_call.1} parent=11 // pred_check_branch
          %162 = sbr.rel (%p160) target = $region16
        $region15: #{tpu_custom_call.1} parent=11 // pred_region
          %p163 = scmp.lt.s32.totalorder %s27, 0
          %s164 = scalar_select %p163, %s27, 0
          %s165 = scalar_lea.vmem %s2, %s164
        $region16: #{tpu_custom_call.1} parent=11 // pred_fallthru
          _
      $region12: #{tpu_custom_call.1} parent=5 // pred_fallthru
        _
      %p166 = scmp.lt.s32.totalorder %s16, 2
      // Predicated region
      $region17: #{tpu_custom_call.1} parent=5 // pred_check
        %p167 = pneg %p166
      $region18: #{tpu_custom_call.1} parent=5 // pred_check_branch
        %169 = sbr.rel (%p167) target = $region20
      $region19: #{tpu_custom_call.1} parent=5 // pred_region
        // Predicated region
        $region21: #{tpu_custom_call.1} parent=19 // pred_check
          %p170 = pneg %p57
        $region22: #{tpu_custom_call.1} parent=19 // pred_check_branch
          %172 = sbr.rel (%p170) target = $region24
        $region23: #{tpu_custom_call.1} parent=19 // pred_region
          %s173 = sand.u32 %s47, 1
          %s174 = scalar_lea.sflag [#allocation4], %s173
          %s175 = sand.u32 %s47, 1
          %s176 = smul.addr %s175, 32
          %s177 = scalar_lea.vmem [#allocation3], %s176
          %s178 = smul.u32 4, %s25
          %s180 = ssub.s32 512, 512
          %181 = vsyncadd %s174, %s180
          %s182 = smul.addr %s23, 8
          %s183 = sadd.s32 %s178, %s182
          %s184 = smul.addr %s183, 128
          %s185 = scalar_lea.hbm %s0, %s184
          %s187 = sshll.u32 %s177, 4
          %s188 = int_to_ptr.vmem [resolvable:$true] %s187
          %190 = dma.hbm_to_vmem [thread:$0]  %s185, 512, %s188, %s174
        $region24: #{tpu_custom_call.1} parent=19 // pred_fallthru
          _
        // Predicated region
        $region25: #{tpu_custom_call.1} parent=19 // pred_check
          %p191 = pneg %p85
        $region26: #{tpu_custom_call.1} parent=19 // pred_check_branch
          %193 = sbr.rel (%p191) target = $region28
        $region27: #{tpu_custom_call.1} parent=19 // pred_region
          %s194 = sand.u32 %s75, 1
          %s195 = scalar_lea.sflag [#allocation7], %s194
          %s196 = sand.u32 %s75, 1
          %s197 = smul.addr %s196, 512
          %s198 = scalar_lea.vmem [#allocation6], %s197
          %s199 = smul.u32 64, %s25
          %s201 = ssub.s32 8192, 8192
          %202 = vsyncadd %s195, %s201
          %s203 = sadd.s32 %s24, %s199
          %s204 = smul.addr %s203, 128
          %s205 = scalar_lea.hbm %s1, %s204
          %s206 = sshll.u32 %s198, 4
          %s207 = int_to_ptr.vmem [resolvable:$true] %s206
          %212 = dma.hbm_to_vmem [thread:$0]  %s205, 8192, %s207, %s195, 128, 128, 8
        $region28: #{tpu_custom_call.1} parent=19 // pred_fallthru
          _
      $region20: #{tpu_custom_call.1} parent=5 // pred_fallthru
        _
      %p213 = scmp.le.s32.totalorder 1, %s16
      %p214 = scmp.lt.s32.totalorder %s16, 3
      %p215 = pnand %p213, %p214
      %p216 = pneg %p215
      // Predicated region
      $region29: #{tpu_custom_call.1} parent=5 // pred_check
        _
      $region30: #{tpu_custom_call.1} parent=5 // pred_check_branch
        %218 = sbr.rel (%p215) target = $region32
      $region31: #{tpu_custom_call.1} parent=5 // pred_region
        %s219 = ssub.s32 %s16, 1
        %s220 = sand.u32 %s50, 1
        %s221 = scalar_lea.sflag [#allocation4], %s220
        %s222 = sand.u32 %s50, 1
        %s223 = smul.addr %s222, 32
        %s224 = scalar_lea.vmem [#allocation3], %s223
        // Predicated region
        $region33: #{tpu_custom_call.1} parent=31 // pred_check
          %p225 = pneg %p63
        $region34: #{tpu_custom_call.1} parent=31 // pred_check_branch
          %227 = sbr.rel (%p225) target = $region36
        $region35: #{tpu_custom_call.1} parent=31 // pred_region
          %228 = dma.done %s221, 512
        $region36: #{tpu_custom_call.1} parent=31 // pred_fallthru
          _
        %s229 = sand.u32 %s78, 1
        %s230 = scalar_lea.sflag [#allocation7], %s229
        %s231 = sand.u32 %s78, 1
        %s232 = smul.addr %s231, 512
        %s233 = scalar_lea.vmem [#allocation6], %s232
        // Predicated region
        $region37: #{tpu_custom_call.1} parent=31 // pred_check
          %p234 = pneg %p91
        $region38: #{tpu_custom_call.1} parent=31 // pred_check_branch
          %236 = sbr.rel (%p234) target = $region40
        $region39: #{tpu_custom_call.1} parent=31 // pred_region
          %237 = dma.done %s230, 8192
        $region40: #{tpu_custom_call.1} parent=31 // pred_fallthru
          _
        %s238 = sand.u32 %s50, 1
        %s239 = scalar_lea.sflag [#allocation4], %s238
        %s240 = sand.u32 %s50, 1
        %s241 = smul.addr %s240, 32
        %s242 = scalar_lea.vmem [#allocation3], %s241
        %p243 = pneg %p63
        %p244 = pneg %p60
        %s245 = sand.u32 %s78, 1
        %s246 = scalar_lea.sflag [#allocation7], %s245
        %s247 = sand.u32 %s78, 1
        %s248 = smul.addr %s247, 512
        %s249 = scalar_lea.vmem [#allocation6], %s248
        %p250 = pneg %p91
        %p251 = pneg %p88
        %p252 = scmp.lt.s32.totalorder %s27, 0
        %s253 = scalar_select %p252, %s27, 0
        %s254 = scalar_lea.vmem %s2, %s253
        %p255 = pneg %p117
        %p256 = pneg %p114
        %p257 = pneg %p145
        %p258 = pneg %p142
        %s259 = smul.u32 4, %s28
        %s260 = smul.u32 64, %s28
        %p261 = scmp.lt.s32.totalorder %s27, 0
        %s262 = scalar_select %p261, %s27, 0
        %s263 = scalar_lea.vmem %s2, %s262
        %p264 = scmp.eq.s32.totalorder %s28, 0
        // Predicated region
        $region41: #{tpu_custom_call.1} parent=31 // pred_check
          %p265 = pneg %p264
        $region42: #{tpu_custom_call.1} parent=31 // pred_check_branch
          %267 = sbr.rel (%p265) target = $region44
        $region43: #{tpu_custom_call.1} parent=31 // pred_region
          %268 = vst [vmem:[#allocation2] sm:$0xff] 0.0
        $region44: #{tpu_custom_call.1} parent=31 // pred_fallthru
          _
        %v269 = vld [vmem:[#allocation2] sm:$0xff]
        %v270 = vld [vmem:[%s224] sm:$0xff]
        %v271 = vld [vmem:[%s224 + $0x8] sm:$0xff]
        %v272 = vld [vmem:[%s224 + $0x10] sm:$0xff]
        %v273 = vld [vmem:[%s224 + $0x18] sm:$0xff]
        %v274 = vld [vmem:[%s233] sm:$0xff]
        %v275 = vld [vmem:[%s233 + $0x8] sm:$0xff]
        %v276 = vld [vmem:[%s233 + $0x10] sm:$0xff]
        %v277 = vld [vmem:[%s233 + $0x18] sm:$0xff]
        %v278 = vld [vmem:[%s233 + $0x20] sm:$0xff]
        %v279 = vld [vmem:[%s233 + $0x28] sm:$0xff]
        %v280 = vld [vmem:[%s233 + $0x30] sm:$0xff]
        %v281 = vld [vmem:[%s233 + $0x38] sm:$0xff]
        %v282 = vld [vmem:[%s233 + $0x40] sm:$0xff]
        %v283 = vld [vmem:[%s233 + $0x48] sm:$0xff]
        %v284 = vld [vmem:[%s233 + $0x50] sm:$0xff]
        %v285 = vld [vmem:[%s233 + $0x58] sm:$0xff]
        %v286 = vld [vmem:[%s233 + $0x60] sm:$0xff]
        %v287 = vld [vmem:[%s233 + $0x68] sm:$0xff]
        %v288 = vld [vmem:[%s233 + $0x70] sm:$0xff]
        %v289 = vld [vmem:[%s233 + $0x78] sm:$0xff]
        %v290 = vld [vmem:[%s233 + $0x80] sm:$0xff]
        %v291 = vld [vmem:[%s233 + $0x88] sm:$0xff]
        %v292 = vld [vmem:[%s233 + $0x90] sm:$0xff]
        %v293 = vld [vmem:[%s233 + $0x98] sm:$0xff]
        %v294 = vld [vmem:[%s233 + $0xa0] sm:$0xff]
        %v295 = vld [vmem:[%s233 + $0xa8] sm:$0xff]
        %v296 = vld [vmem:[%s233 + $0xb0] sm:$0xff]
        %v297 = vld [vmem:[%s233 + $0xb8] sm:$0xff]
        %v298 = vld [vmem:[%s233 + $0xc0] sm:$0xff]
        %v299 = vld [vmem:[%s233 + $0xc8] sm:$0xff]
        %v300 = vld [vmem:[%s233 + $0xd0] sm:$0xff]
        %v301 = vld [vmem:[%s233 + $0xd8] sm:$0xff]
        %v302 = vld [vmem:[%s233 + $0xe0] sm:$0xff]
        %v303 = vld [vmem:[%s233 + $0xe8] sm:$0xff]
        %v304 = vld [vmem:[%s233 + $0xf0] sm:$0xff]
        %v305 = vld [vmem:[%s233 + $0xf8] sm:$0xff]
        %v306 = vld [vmem:[%s233 + $0x100] sm:$0xff]
        %v307 = vld [vmem:[%s233 + $0x108] sm:$0xff]
        %v308 = vld [vmem:[%s233 + $0x110] sm:$0xff]
        %v309 = vld [vmem:[%s233 + $0x118] sm:$0xff]
        %v310 = vld [vmem:[%s233 + $0x120] sm:$0xff]
        %v311 = vld [vmem:[%s233 + $0x128] sm:$0xff]
        %v312 = vld [vmem:[%s233 + $0x130] sm:$0xff]
        %v313 = vld [vmem:[%s233 + $0x138] sm:$0xff]
        %v314 = vld [vmem:[%s233 + $0x140] sm:$0xff]
        %v315 = vld [vmem:[%s233 + $0x148] sm:$0xff]
        %v316 = vld [vmem:[%s233 + $0x150] sm:$0xff]
        %v317 = vld [vmem:[%s233 + $0x158] sm:$0xff]
        %v318 = vld [vmem:[%s233 + $0x160] sm:$0xff]
        %v319 = vld [vmem:[%s233 + $0x168] sm:$0xff]
        %v320 = vld [vmem:[%s233 + $0x170] sm:$0xff]
        %v321 = vld [vmem:[%s233 + $0x178] sm:$0xff]
        %v322 = vld [vmem:[%s233 + $0x180] sm:$0xff]
        %v323 = vld [vmem:[%s233 + $0x188] sm:$0xff]
        %v324 = vld [vmem:[%s233 + $0x190] sm:$0xff]
        %v325 = vld [vmem:[%s233 + $0x198] sm:$0xff]
        %v326 = vld [vmem:[%s233 + $0x1a0] sm:$0xff]
        %v327 = vld [vmem:[%s233 + $0x1a8] sm:$0xff]
        %v328 = vld [vmem:[%s233 + $0x1b0] sm:$0xff]
        %v329 = vld [vmem:[%s233 + $0x1b8] sm:$0xff]
        %v330 = vld [vmem:[%s233 + $0x1c0] sm:$0xff]
        %v331 = vld [vmem:[%s233 + $0x1c8] sm:$0xff]
        %v332 = vld [vmem:[%s233 + $0x1d0] sm:$0xff]
        %v333 = vld [vmem:[%s233 + $0x1d8] sm:$0xff]
        %v334 = vld [vmem:[%s233 + $0x1e0] sm:$0xff]
        %v335 = vld [vmem:[%s233 + $0x1e8] sm:$0xff]
        %v336 = vld [vmem:[%s233 + $0x1f0] sm:$0xff]
        %v337 = vld [vmem:[%s233 + $0x1f8] sm:$0xff]
        %338 = vmatprep.subr.mxu0 0.0
        %339 = vmatpush1.msra.mxu0 %v274
        %340 = vmatprep.subr.mxu0 0.0
        %341 = vmatpush1.msra.mxu0 %v275
        %342 = vmatprep.subr.mxu0 0.0
        %343 = vmatpush1.msra.mxu0 %v276
        %344 = vmatprep.subr.mxu0 0.0
        %345 = vmatpush1.msra.mxu0 %v277
        %346 = vmatprep.subr.mxu0 0.0
        %347 = vmatpush1.msra.mxu0 %v278
        %348 = vmatprep.subr.mxu0 0.0
        %349 = vmatpush1.msra.mxu0 %v279
        %350 = vmatprep.subr.mxu0 0.0
        %351 = vmatpush1.msra.mxu0 %v280
        %352 = vmatprep.subr.mxu0 0.0
        %353 = vmatpush1.msra.mxu0 %v281
        %354 = vmatprep.subr.mxu0 0.0
        %355 = vmatpush1.msra.mxu0 %v282
        %356 = vmatprep.subr.mxu0 0.0
        %357 = vmatpush1.msra.mxu0 %v283
        %358 = vmatprep.subr.mxu0 0.0
        %359 = vmatpush1.msra.mxu0 %v284
        %360 = vmatprep.subr.mxu0 0.0
        %361 = vmatpush1.msra.mxu0 %v285
        %362 = vmatprep.subr.mxu0 0.0
        %363 = vmatpush1.msra.mxu0 %v286
        %364 = vmatprep.subr.mxu0 0.0
        %365 = vmatpush1.msra.mxu0 %v287
        %366 = vmatprep.subr.mxu0 0.0
        %367 = vmatpush1.msra.mxu0 %v288
        %368 = vmatprep.subr.mxu0 0.0
        %369 = vmatpush1.msra.mxu0 %v289
        %370 = vmatprep.subr.mxu0 0.0
        %371 = vmatpush1.msra.mxu0 %v290
        %372 = vmatprep.subr.mxu0 0.0
        %373 = vmatpush1.msra.mxu0 %v291
        %374 = vmatprep.subr.mxu0 0.0
        %375 = vmatpush1.msra.mxu0 %v292
        %376 = vmatprep.subr.mxu0 0.0
        %377 = vmatpush1.msra.mxu0 %v293
        %378 = vmatprep.subr.mxu0 0.0
        %379 = vmatpush1.msra.mxu0 %v294
        %380 = vmatprep.subr.mxu0 0.0
        %381 = vmatpush1.msra.mxu0 %v295
        %382 = vmatprep.subr.mxu0 0.0
        %383 = vmatpush1.msra.mxu0 %v296
        %384 = vmatprep.subr.mxu0 0.0
        %385 = vmatpush1.msra.mxu0 %v297
        %386 = vmatprep.subr.mxu0 0.0
        %387 = vmatpush1.msra.mxu0 %v298
        %388 = vmatprep.subr.mxu0 0.0
        %389 = vmatpush1.msra.mxu0 %v299
        %390 = vmatprep.subr.mxu0 0.0
        %391 = vmatpush1.msra.mxu0 %v300
        %392 = vmatprep.subr.mxu0 0.0
        %393 = vmatpush1.msra.mxu0 %v301
        %394 = vmatprep.subr.mxu0 0.0
        %395 = vmatpush1.msra.mxu0 %v302
        %396 = vmatprep.subr.mxu0 0.0
        %397 = vmatpush1.msra.mxu0 %v303
        %398 = vmatprep.subr.mxu0 0.0
        %399 = vmatpush1.msra.mxu0 %v304
        %400 = vmatprep.subr.mxu0 0.0
        %401 = vmatpush1.msra.mxu0 %v305
        %402 = vmatprep.mubr.f32.mxu0 %v271
        %403 = vmatmul.mubr.f32.gmra.mrb[0].mxu0 %v270
        %v404 = vpop.f32.mrb[0].mxu0
        %v405 = vadd.f32 0.0, %v404
        %v406 = vpop.f32.mrb[0].mxu0
        %407 = vdwg.mxu0
        %408 = vmatprep.subr.mxu0 0.0
        %409 = vmatpush1.msra.mxu0 %v306
        %410 = vmatprep.subr.mxu0 0.0
        %411 = vmatpush1.msra.mxu0 %v307
        %412 = vmatprep.subr.mxu0 0.0
        %413 = vmatpush1.msra.mxu0 %v308
        %414 = vmatprep.subr.mxu0 0.0
        %415 = vmatpush1.msra.mxu0 %v309
        %416 = vmatprep.subr.mxu0 0.0
        %417 = vmatpush1.msra.mxu0 %v310
        %418 = vmatprep.subr.mxu0 0.0
        %419 = vmatpush1.msra.mxu0 %v311
        %420 = vmatprep.subr.mxu0 0.0
        %421 = vmatpush1.msra.mxu0 %v312
        %422 = vmatprep.subr.mxu0 0.0
        %423 = vmatpush1.msra.mxu0 %v313
        %424 = vmatprep.subr.mxu0 0.0
        %425 = vmatpush1.msra.mxu0 %v314
        %426 = vmatprep.subr.mxu0 0.0
        %427 = vmatpush1.msra.mxu0 %v315
        %428 = vmatprep.subr.mxu0 0.0
        %429 = vmatpush1.msra.mxu0 %v316
        %430 = vmatprep.subr.mxu0 0.0
        %431 = vmatpush1.msra.mxu0 %v317
        %432 = vmatprep.subr.mxu0 0.0
        %433 = vmatpush1.msra.mxu0 %v318
        %434 = vmatprep.subr.mxu0 0.0
        %435 = vmatpush1.msra.mxu0 %v319
        %436 = vmatprep.subr.mxu0 0.0
        %437 = vmatpush1.msra.mxu0 %v320
        %438 = vmatprep.subr.mxu0 0.0
        %439 = vmatpush1.msra.mxu0 %v321
        %440 = vmatprep.subr.mxu0 0.0
        %441 = vmatpush1.msra.mxu0 %v322
        %442 = vmatprep.subr.mxu0 0.0
        %443 = vmatpush1.msra.mxu0 %v323
        %444 = vmatprep.subr.mxu0 0.0
        %445 = vmatpush1.msra.mxu0 %v324
        %446 = vmatprep.subr.mxu0 0.0
        %447 = vmatpush1.msra.mxu0 %v325
        %448 = vmatprep.subr.mxu0 0.0
        %449 = vmatpush1.msra.mxu0 %v326
        %450 = vmatprep.subr.mxu0 0.0
        %451 = vmatpush1.msra.mxu0 %v327
        %452 = vmatprep.subr.mxu0 0.0
        %453 = vmatpush1.msra.mxu0 %v328
        %454 = vmatprep.subr.mxu0 0.0
        %455 = vmatpush1.msra.mxu0 %v329
        %456 = vmatprep.subr.mxu0 0.0
        %457 = vmatpush1.msra.mxu0 %v330
        %458 = vmatprep.subr.mxu0 0.0
        %459 = vmatpush1.msra.mxu0 %v331
        %460 = vmatprep.subr.mxu0 0.0
        %461 = vmatpush1.msra.mxu0 %v332
        %462 = vmatprep.subr.mxu0 0.0
        %463 = vmatpush1.msra.mxu0 %v333
        %464 = vmatprep.subr.mxu0 0.0
        %465 = vmatpush1.msra.mxu0 %v334
        %466 = vmatprep.subr.mxu0 0.0
        %467 = vmatpush1.msra.mxu0 %v335
        %468 = vmatprep.subr.mxu0 0.0
        %469 = vmatpush1.msra.mxu0 %v336
        %470 = vmatprep.subr.mxu0 0.0
        %471 = vmatpush1.msra.mxu0 %v337
        %472 = vmatprep.mubr.f32.mxu0 %v273
        %473 = vmatmul.mubr.f32.gmra.mrb[0].mxu0 %v272
        %v474 = vpop.f32.mrb[0].mxu0
        %v475 = vadd.f32 %v405, %v474
        %v476 = vpop.f32.mrb[0].mxu0
        %477 = vdwg.mxu0
        %v478 = vadd.f32 %v269, %v475
        %479 = vst [vmem:[#allocation2] sm:$0xff] %v478
        %p480 = scmp.eq.s32.totalorder %s28, 1
        // Predicated region
        $region45: #{tpu_custom_call.1} parent=31 // pred_check
          %p481 = pneg %p480
        $region46: #{tpu_custom_call.1} parent=31 // pred_check_branch
          %483 = sbr.rel (%p481) target = $region48
        $region47: #{tpu_custom_call.1} parent=31 // pred_region
          %v484 = vld [vmem:[#allocation2] sm:$0xff]
          %v485 = vld [vmem:[%s263] sm:$0x1]
          %v487 = vlaneseq
          %v488 = vshrl.u32 %v487, 7
          %v489 = vsub.s32 0, %v488
          %v490 = vrot.slane %v485, %v489
          %v492 = vadd.f32 %v484, %v490
          %493 = vst [vmem:[#allocation8] sm:$0xff] %v492
        $region48: #{tpu_custom_call.1} parent=31 // pred_fallthru
          _
        // Predicated region
        $region49: #{tpu_custom_call.1} parent=31 // pred_check
          %p494 = pneg %p142
        $region50: #{tpu_custom_call.1} parent=31 // pred_check_branch
          %496 = sbr.rel (%p494) target = $region52
        $region51: #{tpu_custom_call.1} parent=31 // pred_region
          %s498 = ssub.s32 128, 128
          %499 = vsyncadd [#allocation5], %s498
          %s500 = sadd.s32 %s27, %s26
          %s501 = smul.addr %s500, 128
          %s502 = scalar_lea.hbm %s3, %s501
          %s504 = sshll.u32 [#allocation8], 4
          %s505 = int_to_ptr.vmem [resolvable:$true] %s504
          %507 = dma.vmem_to_hbm [thread:$0]  %s505, 128, %s502, [#allocation5]
        $region52: #{tpu_custom_call.1} parent=31 // pred_fallthru
          _
        // Predicated region
        $region53: #{tpu_custom_call.1} parent=31 // pred_check
          %p508 = pneg %p142
        $region54: #{tpu_custom_call.1} parent=31 // pred_check_branch
          %510 = sbr.rel (%p508) target = $region56
        $region55: #{tpu_custom_call.1} parent=31 // pred_region
          %511 = dma.done [#allocation5], 128
        $region56: #{tpu_custom_call.1} parent=31 // pred_fallthru
          _
      $region32: #{tpu_custom_call.1} parent=5 // pred_fallthru
        _
      %p512 = scmp.le.s32.totalorder 2, %s16
      // Predicated region
      $region57: #{tpu_custom_call.1} parent=5 // pred_check
        %p513 = pneg %p512
      $region58: #{tpu_custom_call.1} parent=5 // pred_check_branch
        %515 = sbr.rel (%p513) target = $region60
      $region59: #{tpu_custom_call.1} parent=5 // pred_region
        %s516 = ssub.s32 %s16, 2
      $region60: #{tpu_custom_call.1} parent=5 // pred_fallthru
        _
    $region6: #{tpu_custom_call.1} parent=1 // loop_footer
      %s20 = sadd.s32 1, %s16
    $region7: #{tpu_custom_call.1} parent=1 // loop_footer_branch
      %15 = sbr.rel target = $region3
    $region8: #{tpu_custom_call.1} parent=1 // loop_exit
      _
    %517 = vsyncpa [#allocation4], 1
    %s518 = scalar_lea.sflag [#allocation4], 1
    %519 = vsyncpa %s518, 1
    %520 = vsyncpa [#allocation7], 1
    %s521 = scalar_lea.sflag [#allocation7], 1
    %522 = vsyncpa %s521, 1
    %523 = vsyncpa [#allocation5], 1
    %s524 = scalar_lea.sflag [#allocation5], 1
    %525 = vsyncpa %s524, 1

</llo_original>
